<compile_context>
chip_gen: v5e
topology: v5e:2x2
jax: 0.10.0
libtpu: 0.0.40
codegen_flags: <defaults>
</compile_context>

<pallas_src>
import functools

import jax
import jax.numpy as jnp
from jax.experimental import pallas as pl
from jax.experimental.pallas import tpu as pltpu


# --------------------------------- kernel ------------------------------------

def self_attention_kernel(v_ref, k_ref, q_ref, bias_ref,
                          wqkv_ref, wo_ref, bo_ref, out_ref,
                          *, heads, head_dim, embed_size):
    H, D = heads, head_dim
    q = q_ref[0]          # (H, lq, D)
    k = k_ref[0]          # (H, lk, D)
    v = v_ref[0]          # (H, lk, D)
    bias = bias_ref[0]    # (lq, lk) additive mask: 0 = keep, -1e20 = masked

    lq = q.shape[1]
    lk = k.shape[1]

    wq = wqkv_ref[0:D, :]           # (D, D) right-multiply form (W^T)
    wk = wqkv_ref[D:2 * D, :]
    wv = wqkv_ref[2 * D:3 * D, :]

    # Per-head projections as single 2-D matmuls (heads folded into sublanes).
    qp = jnp.dot(q.reshape(H * lq, D), wq,
                 preferred_element_type=jnp.float32).reshape(H, lq, D)
    kp = jnp.dot(k.reshape(H * lk, D), wk,
                 preferred_element_type=jnp.float32).reshape(H, lk, D)
    vp = jnp.dot(v.reshape(H * lk, D), wv,
                 preferred_element_type=jnp.float32).reshape(H, lk, D)

    # All-head scores in one batched einsum: (H, lq, lk).
    s = jnp.einsum('hqd,hkd->hqk', qp, kp,
                   preferred_element_type=jnp.float32)
    # PyTorch applies masked_fill BEFORE the 1/sqrt(embed_size) scale.
    s = (s + bias[None, :, :]) * (1.0 / (float(embed_size) ** 0.5))

    m = jnp.max(s, axis=-1, keepdims=True)
    e = jnp.exp(s - m)
    p = e / jnp.sum(e, axis=-1, keepdims=True)

    # Weighted values per head: (H, lq, D).
    o = jnp.einsum('hqk,hkd->hqd', p, vp, preferred_element_type=jnp.float32)

    # fc_out in head-major space: Wo is pre-split per head into (H, D, E_pad);
    # summing the per-head partials over H is the concat-free equivalent of
    # reshape(lq, E) @ Wo.
    partial = jnp.einsum('hqd,hde->hqe', o, wo_ref[...],
                         preferred_element_type=jnp.float32)
    out = jnp.sum(partial, axis=0) + bo_ref[...]       # (lq, E_pad), lane-dense
    out_ref[0] = out.astype(out_ref.dtype)


# -------------------------------- wrapper -------------------------------------

def self_attention(values, keys, query, mask, params, *, heads):
    B, lq, E = query.shape
    lk = keys.shape[1]
    assert values.shape[1] == lk, "value_len must equal key_len"
    D = E // heads
    assert D * heads == E, "embed size not divisible by heads"
    E_pad = ((E + 127) // 128) * 128        # lane-dense output width

    # Head-major activations: (B, H, L, D) -- layout plumbing done in XLA.
    def to_heads(x):
        b, L, _ = x.shape
        return x.reshape(b, L, heads, D).transpose(0, 2, 1, 3)

    q_h = to_heads(query).astype(jnp.float32)
    k_h = to_heads(keys).astype(jnp.float32)
    v_h = to_heads(values).astype(jnp.float32)

    # Additive mask (0 keep / -1e20 masked); equivalent to masked_fill for any
    # row with at least one unmasked entry.
    if mask is None:
        bias = jnp.zeros((B, lq, lk), jnp.float32)
    else:
        bias = jnp.where(mask == 0, jnp.float32(-1e20), jnp.float32(0.0))
        bias = jnp.broadcast_to(bias.astype(jnp.float32), (B, lq, lk))

    # Pack parameters. nn.Linear stores (out, in) weights -> right-multiply by W^T.
    w_qkv = jnp.concatenate(
        [params["wq"].T, params["wk"].T, params["wv"].T],
        axis=0).astype(jnp.float32)                       # (3D, D)
    wo = jnp.zeros((E, E_pad), jnp.float32).at[:, :E].set(
        params["w_fc"].T.astype(jnp.float32))
    wo_heads = wo.reshape(heads, D, E_pad)                # (H, D, E_pad)
    bo = jnp.zeros((1, E_pad), jnp.float32).at[:, :E].set(
        params["b_fc"].reshape(1, E).astype(jnp.float32))

    flops = B * heads * 2 * ((lq + 2 * lk) * D * D        # projections
                             + 2 * lq * lk * D            # scores + AV
                             + lq * D * E_pad)            # fc_out
    bytes_accessed = 4 * (q_h.size + k_h.size + v_h.size + bias.size
                          + w_qkv.size + wo_heads.size + bo.size
                          + B * lq * E_pad)

    kernel = functools.partial(self_attention_kernel, heads=heads,
                               head_dim=D, embed_size=E)

    out_pad = pl.pallas_call(
        kernel,
        out_shape=jax.ShapeDtypeStruct((B, lq, E_pad), jnp.float32),
        grid_spec=pltpu.PrefetchScalarGridSpec(
            num_scalar_prefetch=0,
            grid=(B,),
            in_specs=[
                pl.BlockSpec((1, heads, lk, D), lambda b: (b, 0, 0, 0)),  # values
                pl.BlockSpec((1, heads, lk, D), lambda b: (b, 0, 0, 0)),  # keys
                pl.BlockSpec((1, heads, lq, D), lambda b: (b, 0, 0, 0)),  # queries
                pl.BlockSpec((1, lq, lk), lambda b: (b, 0, 0)),           # additive mask
                pl.BlockSpec((3 * D, D), lambda b: (0, 0)),               # Wq^T;Wk^T;Wv^T (resident)
                pl.BlockSpec((heads, D, E_pad), lambda b: (0, 0, 0)),     # fc_out weight (resident)
                pl.BlockSpec((1, E_pad), lambda b: (0, 0)),               # fc_out bias (resident)
            ],
            out_specs=pl.BlockSpec((1, lq, E_pad), lambda b: (b, 0, 0)),
        ),
        compiler_params=pltpu.CompilerParams(
            dimension_semantics=("parallel",)),
        cost_estimate=pl.CostEstimate(
            flops=flops,
            transcendentals=B * heads * lq * lk,
            bytes_accessed=bytes_accessed),
    )(v_h, k_h, q_h, bias, w_qkv, wo_heads, bo)

    return out_pad[..., :E]


# ------------------------- pure-JAX reference (check) --------------------------

def self_attention_ref(values, keys, query, mask, params, *, heads):
    B, lq, E = query.shape
    lk = keys.shape[1]
    D = E // heads
    v = values.reshape(B, lk, heads, D) @ params["wv"].T
    k = keys.reshape(B, lk, heads, D) @ params["wk"].T
    q = query.reshape(B, lq, heads, D) @ params["wq"].T
    match = jnp.einsum('nqhd,nkhd->nhqk', q, k)
    if mask is not None:
        match = jnp.where(mask[:, None, :, :] == 0, jnp.float32(-1e20), match)
    att = jax.nn.softmax(match / (E ** 0.5), axis=3)
    out = jnp.einsum('nhql,nlhd->nqhd', att, v).reshape(B, lq, E)
    return out @ params["w_fc"].T + params["b_fc"]


# ----------------------------------- main --------------------------------------

if __name__ == "__main__":
    embed_size = 32
    heads = 4
    head_dim = embed_size // heads
    B, lq, lk = 2, 8, 8

    key = jax.random.PRNGKey(0)
    ks = jax.random.split(key, 8)

    def rnd(k, shape, scale=0.1):
        return jax.random.normal(k, shape, dtype=jnp.float32) * scale

    params = {
        # nn.Linear(head_dim, head_dim, bias=False).weight  (out, in)
        "wq": rnd(ks[0], (head_dim, head_dim)),
        "wk": rnd(ks[1], (head_dim, head_dim)),
        "wv": rnd(ks[2], (head_dim, head_dim)),
        # nn.Linear(embed_size, embed_size).weight / .bias
        "w_fc": rnd(ks[3], (embed_size, embed_size)),
        "b_fc": rnd(ks[4], (embed_size,)),
    }

    query = jax.random.normal(ks[5], (B, lq, embed_size), dtype=jnp.float32)
    keys_in = jax.random.normal(ks[6], (B, lk, embed_size), dtype=jnp.float32)
    values_in = jax.random.normal(ks[7], (B, lk, embed_size), dtype=jnp.float32)

    # causal mask (1 = keep, 0 = masked), shared across heads
    causal = jnp.tril(jnp.ones((lq, lk), jnp.float32))
    mask = jnp.broadcast_to(causal, (B, lq, lk))

    out = self_attention(values_in, keys_in, query, mask, params, heads=heads)
    jax.block_until_ready(out)
    assert out.shape == (B, lq, embed_size)

    ref = self_attention_ref(values_in, keys_in, query, mask, params, heads=heads)
    err = float(jnp.max(jnp.abs(out - ref)))
    assert err < 2e-2, f"max abs error too large: {err}"
    print("KERNEL_OK")
</pallas_src>

<mosaic_0001>
module attributes {stable_mosaic.version = 11 : i64} {
  func.func @self_attention_kernel(%arg0: i32, %arg1: memref<1x4x8x8xf32, #tpu.memory_space<vmem>>, %arg2: memref<1x4x8x8xf32, #tpu.memory_space<vmem>>, %arg3: memref<1x4x8x8xf32, #tpu.memory_space<vmem>>, %arg4: memref<1x8x8xf32, #tpu.memory_space<vmem>>, %arg5: memref<24x8xf32, #tpu.memory_space<vmem>>, %arg6: memref<4x8x128xf32, #tpu.memory_space<vmem>>, %arg7: memref<1x128xf32, #tpu.memory_space<vmem>>, %arg8: memref<1x8x128xf32, #tpu.memory_space<vmem>>) attributes {dimension_semantics = [#tpu.dimension_semantics<parallel>], iteration_bounds = array<i64: 2>, scalar_prefetch = 0 : i64, scratch_operands = 0 : i64, tpu.core_type = #tpu.core_type<tc>, window_params = [{transform_indices = @transform_0, window_bounds = array<i64: 1, 4, 8, 8>}, {transform_indices = @transform_1, window_bounds = array<i64: 1, 4, 8, 8>}, {transform_indices = @transform_2, window_bounds = array<i64: 1, 4, 8, 8>}, {transform_indices = @transform_3, window_bounds = array<i64: 1, 8, 8>}, {pipeline_mode = #tpu.pipeline_mode<synchronous>, transform_indices = @transform_4, window_bounds = array<i64: 24, 8>}, {pipeline_mode = #tpu.pipeline_mode<synchronous>, transform_indices = @transform_5, window_bounds = array<i64: 4, 8, 128>}, {pipeline_mode = #tpu.pipeline_mode<synchronous>, transform_indices = @transform_6, window_bounds = array<i64: 1, 128>}, {transform_indices = @transform_7, window_bounds = array<i64: 1, 8, 128>}]} {
    %c0 = arith.constant 0 : index
    %c0_0 = arith.constant 0 : index
    %c0_1 = arith.constant 0 : index
    %c0_2 = arith.constant 0 : index
    %0 = vector.load %arg3[%c0, %c0_0, %c0_1, %c0_2] : memref<1x4x8x8xf32, #tpu.memory_space<vmem>>, vector<1x4x8x8xf32>
    %1 = vector.shape_cast %0 : vector<1x4x8x8xf32> to vector<4x8x8xf32>
    %c0_3 = arith.constant 0 : index
    %c0_4 = arith.constant 0 : index
    %c0_5 = arith.constant 0 : index
    %c0_6 = arith.constant 0 : index
    %2 = vector.load %arg2[%c0_3, %c0_4, %c0_5, %c0_6] : memref<1x4x8x8xf32, #tpu.memory_space<vmem>>, vector<1x4x8x8xf32>
    %3 = vector.shape_cast %2 : vector<1x4x8x8xf32> to vector<4x8x8xf32>
    %c0_7 = arith.constant 0 : index
    %c0_8 = arith.constant 0 : index
    %c0_9 = arith.constant 0 : index
    %c0_10 = arith.constant 0 : index
    %4 = vector.load %arg1[%c0_7, %c0_8, %c0_9, %c0_10] : memref<1x4x8x8xf32, #tpu.memory_space<vmem>>, vector<1x4x8x8xf32>
    %5 = vector.shape_cast %4 : vector<1x4x8x8xf32> to vector<4x8x8xf32>
    %c0_11 = arith.constant 0 : index
    %c0_12 = arith.constant 0 : index
    %c0_13 = arith.constant 0 : index
    %6 = vector.load %arg4[%c0_11, %c0_12, %c0_13] : memref<1x8x8xf32, #tpu.memory_space<vmem>>, vector<1x8x8xf32>
    %7 = vector.shape_cast %6 : vector<1x8x8xf32> to vector<8x8xf32>
    %c0_14 = arith.constant 0 : index
    %c0_15 = arith.constant 0 : index
    %8 = vector.load %arg5[%c0_14, %c0_15] : memref<24x8xf32, #tpu.memory_space<vmem>>, vector<8x8xf32>
    %c8 = arith.constant 8 : index
    %c0_16 = arith.constant 0 : index
    %9 = vector.load %arg5[%c8, %c0_16] : memref<24x8xf32, #tpu.memory_space<vmem>>, vector<8x8xf32>
    %c16 = arith.constant 16 : index
    %c0_17 = arith.constant 0 : index
    %10 = vector.load %arg5[%c16, %c0_17] : memref<24x8xf32, #tpu.memory_space<vmem>>, vector<8x8xf32>
    %11 = vector.shape_cast %1 : vector<4x8x8xf32> to vector<32x8xf32>
    %cst = arith.constant dense<0.000000e+00> : vector<32x8xf32>
    %12 = tpu.matmul %11, %8, %cst {dimension_numbers = #tpu.dot_dimension_numbers<[1], [0], [0], [1], [0, 0, 1, 1], [], []>} : vector<32x8xf32>, vector<8x8xf32>, vector<32x8xf32> -> vector<32x8xf32>
    %13 = vector.shape_cast %12 : vector<32x8xf32> to vector<4x8x8xf32>
    %14 = vector.shape_cast %3 : vector<4x8x8xf32> to vector<32x8xf32>
    %cst_18 = arith.constant dense<0.000000e+00> : vector<32x8xf32>
    %15 = tpu.matmul %14, %9, %cst_18 {dimension_numbers = #tpu.dot_dimension_numbers<[1], [0], [0], [1], [0, 0, 1, 1], [], []>} : vector<32x8xf32>, vector<8x8xf32>, vector<32x8xf32> -> vector<32x8xf32>
    %16 = vector.shape_cast %15 : vector<32x8xf32> to vector<4x8x8xf32>
    %17 = vector.shape_cast %5 : vector<4x8x8xf32> to vector<32x8xf32>
    %cst_19 = arith.constant dense<0.000000e+00> : vector<32x8xf32>
    %18 = tpu.matmul %17, %10, %cst_19 {dimension_numbers = #tpu.dot_dimension_numbers<[1], [0], [0], [1], [0, 0, 1, 1], [], []>} : vector<32x8xf32>, vector<8x8xf32>, vector<32x8xf32> -> vector<32x8xf32>
    %19 = vector.shape_cast %18 : vector<32x8xf32> to vector<4x8x8xf32>
    "tpu.trace_start"() <{level = 10 : i32, message = "hqd,hkd->hqk"}> : () -> ()
    %cst_20 = arith.constant dense<0.000000e+00> : vector<4x8x8xf32>
    %20 = tpu.matmul %13, %16, %cst_20 {dimension_numbers = #tpu.dot_dimension_numbers<[2], [2], [1], [1], [0, 0, 0, 1, 1, 1], [0], [0]>} : vector<4x8x8xf32>, vector<4x8x8xf32>, vector<4x8x8xf32> -> vector<4x8x8xf32>
    "tpu.trace_stop"() : () -> ()
    %21 = vector.shape_cast %7 : vector<8x8xf32> to vector<1x8x8xf32>
    %22 = vector.broadcast %21 : vector<1x8x8xf32> to vector<4x8x8xf32>
    %23 = arith.addf %20, %22 : vector<4x8x8xf32>
    %cst_21 = arith.constant 0.176776692 : f32
    %24 = vector.broadcast %cst_21 : f32 to vector<4x8x8xf32>
    %25 = arith.mulf %23, %24 : vector<4x8x8xf32>
    %cst_22 = arith.constant dense<0xFF800000> : vector<4x8xf32>
    %26 = vector.multi_reduction <maximumf>, %25, %cst_22 [2] : vector<4x8x8xf32> to vector<4x8xf32>
    %27 = vector.shape_cast %26 : vector<4x8xf32> to vector<4x8x1xf32>
    %28 = vector.broadcast %27 : vector<4x8x1xf32> to vector<4x8x8xf32>
    %29 = arith.subf %25, %28 : vector<4x8x8xf32>
    %30 = math.exp %29 : vector<4x8x8xf32>
    %cst_23 = arith.constant dense<0.000000e+00> : vector<4x8xf32>
    %31 = vector.multi_reduction <add>, %30, %cst_23 [2] : vector<4x8x8xf32> to vector<4x8xf32>
    %32 = vector.shape_cast %31 : vector<4x8xf32> to vector<4x8x1xf32>
    %33 = vector.broadcast %32 : vector<4x8x1xf32> to vector<4x8x8xf32>
    %34 = arith.divf %30, %33 : vector<4x8x8xf32>
    "tpu.trace_start"() <{level = 10 : i32, message = "hqk,hkd->hqd"}> : () -> ()
    %cst_24 = arith.constant dense<0.000000e+00> : vector<4x8x8xf32>
    %35 = tpu.matmul %34, %19, %cst_24 {dimension_numbers = #tpu.dot_dimension_numbers<[2], [1], [1], [2], [0, 0, 0, 1, 1, 2], [0], [0]>} : vector<4x8x8xf32>, vector<4x8x8xf32>, vector<4x8x8xf32> -> vector<4x8x8xf32>
    "tpu.trace_stop"() : () -> ()
    %c0_25 = arith.constant 0 : index
    %c0_26 = arith.constant 0 : index
    %c0_27 = arith.constant 0 : index
    %36 = vector.load %arg6[%c0_25, %c0_26, %c0_27] : memref<4x8x128xf32, #tpu.memory_space<vmem>>, vector<4x8x128xf32>
    "tpu.trace_start"() <{level = 10 : i32, message = "hqd,hde->hqe"}> : () -> ()
    %cst_28 = arith.constant dense<0.000000e+00> : vector<4x8x128xf32>
    %37 = tpu.matmul %35, %36, %cst_28 {dimension_numbers = #tpu.dot_dimension_numbers<[2], [1], [1], [2], [0, 0, 0, 1, 1, 2], [0], [0]>} : vector<4x8x8xf32>, vector<4x8x128xf32>, vector<4x8x128xf32> -> vector<4x8x128xf32>
    "tpu.trace_stop"() : () -> ()
    %cst_29 = arith.constant dense<0.000000e+00> : vector<8x128xf32>
    %38 = vector.multi_reduction <add>, %37, %cst_29 [0] : vector<4x8x128xf32> to vector<8x128xf32>
    %c0_30 = arith.constant 0 : index
    %c0_31 = arith.constant 0 : index
    %39 = vector.load %arg7[%c0_30, %c0_31] : memref<1x128xf32, #tpu.memory_space<vmem>>, vector<1x128xf32>
    %40 = vector.broadcast %39 : vector<1x128xf32> to vector<8x128xf32>
    %41 = arith.addf %38, %40 : vector<8x128xf32>
    %c0_32 = arith.constant 0 : index
    %c0_33 = arith.constant 0 : index
    %c0_34 = arith.constant 0 : index
    %42 = vector.load %arg8[%c0_32, %c0_33, %c0_34] : memref<1x8x128xf32, #tpu.memory_space<vmem>>, vector<1x8x128xf32>
    %43 = vector.shape_cast %42 : vector<1x8x128xf32> to vector<8x128xf32>
    %44 = vector.shape_cast %41 : vector<8x128xf32> to vector<1x8x128xf32>
    tpu.vector_store %arg8[%c0_32, %c0_33, %c0_34], %44 {strides = array<i32>} : memref<1x8x128xf32, #tpu.memory_space<vmem>>, vector<1x8x128xf32>,
    return
  }
  func.func @transform_0(%arg0: i32) -> (i32, i32, i32, i32) {
    %c0_i32 = arith.constant 0 : i32
    %c0_i32_0 = arith.constant 0 : i32
    %c0_i32_1 = arith.constant 0 : i32
    %c0_i32_2 = arith.constant 0 : i32
    return %arg0, %c0_i32, %c0_i32_0, %c0_i32_1 : i32, i32, i32, i32
  }
  func.func @transform_1(%arg0: i32) -> (i32, i32, i32, i32) {
    %c0_i32 = arith.constant 0 : i32
    %c0_i32_0 = arith.constant 0 : i32
    %c0_i32_1 = arith.constant 0 : i32
    %c0_i32_2 = arith.constant 0 : i32
    return %arg0, %c0_i32, %c0_i32_0, %c0_i32_1 : i32, i32, i32, i32
  }
  func.func @transform_2(%arg0: i32) -> (i32, i32, i32, i32) {
    %c0_i32 = arith.constant 0 : i32
    %c0_i32_0 = arith.constant 0 : i32
    %c0_i32_1 = arith.constant 0 : i32
    %c0_i32_2 = arith.constant 0 : i32
    return %arg0, %c0_i32, %c0_i32_0, %c0_i32_1 : i32, i32, i32, i32
  }
  func.func @transform_3(%arg0: i32) -> (i32, i32, i32) {
    %c0_i32 = arith.constant 0 : i32
    %c0_i32_0 = arith.constant 0 : i32
    %c0_i32_1 = arith.constant 0 : i32
    return %arg0, %c0_i32, %c0_i32_0 : i32, i32, i32
  }
  func.func @transform_4(%arg0: i32) -> (i32, i32) {
    %c0_i32 = arith.constant 0 : i32
    %c0_i32_0 = arith.constant 0 : i32
    %c0_i32_1 = arith.constant 0 : i32
    return %c0_i32, %c0_i32_0 : i32, i32
  }
  func.func @transform_5(%arg0: i32) -> (i32, i32, i32) {
    %c0_i32 = arith.constant 0 : i32
    %c0_i32_0 = arith.constant 0 : i32
    %c0_i32_1 = arith.constant 0 : i32
    %c0_i32_2 = arith.constant 0 : i32
    return %c0_i32, %c0_i32_0, %c0_i32_1 : i32, i32, i32
  }
  func.func @transform_6(%arg0: i32) -> (i32, i32) {
    %c0_i32 = arith.constant 0 : i32
    %c0_i32_0 = arith.constant 0 : i32
    %c0_i32_1 = arith.constant 0 : i32
    return %c0_i32, %c0_i32_0 : i32, i32
  }
  func.func @transform_7(%arg0: i32) -> (i32, i32, i32) {
    %c0_i32 = arith.constant 0 : i32
    %c0_i32_0 = arith.constant 0 : i32
    %c0_i32_1 = arith.constant 0 : i32
    return %arg0, %c0_i32, %c0_i32_0 : i32, i32, i32
  }
}

</mosaic_0001>

<llo_original>
// kernel: tpu_custom_call.1
$region0: #{tpu_custom_call.1}
  #allocation0 [shape = 'u32[]', space=smem, size = 0x4, offset = 0x4, fixed_abs, tag = 'smem constant byte address 0x4 - core index']
  #allocation1 [shape = 'u32[72,128]{1,0:T(1,128)}', space=vmem, size = 0x9000, scoped, tag = 'internal scratch']
  %s0 = inlined_call_operand.hbm [shape: f32[2,4,8,8], index: 0, kind: input, shape index: {}]
  %s1 = inlined_call_operand.hbm [shape: f32[2,4,8,8], index: 1, kind: input, shape index: {}]
  %s2 = inlined_call_operand.hbm [shape: f32[2,4,8,8], index: 2, kind: input, shape index: {}]
  %s3 = inlined_call_operand.hbm [shape: f32[2,8,8], index: 3, kind: input, shape index: {}]
  %s4 = inlined_call_operand.vmem [shape: f32[24,8], index: 4, kind: input, shape index: {}]
  %s5 = inlined_call_operand.vmem [shape: f32[4,8,128], index: 5, kind: input, shape index: {}]
  %s6 = inlined_call_operand.vmem [shape: f32[1,128], index: 6, kind: input, shape index: {}]
  %s7 = inlined_call_operand.hbm [shape: f32[2,8,128], index: 7, kind: output, shape index: {}]
  %s8 = sld [smem:[#allocation0]]
  $region77: #{tpu_custom_call.1} parent=0
    _
  %s10 = ssub.s32 1, %s8
  %s11 = scalar_select 0, %s10, %s8
  $region1: #{tpu_custom_call.1} parent=0
    #allocation2 [shape = 'u8[32768]{0}', space=vmem, size = 0x8000, scoped, tag = 'input window, operand 0']
    #allocation3 [shape = 's32[2]{0}', space=sflag, size = 0x8, scoped, tag = 'scoped memory for tpu_custom_call.1']
    #allocation4 [shape = 's32[2]{0}', space=sflag, size = 0x8, scoped, tag = 'scoped memory for tpu_custom_call.1']
    #allocation5 [shape = 'u8[32768]{0}', space=vmem, size = 0x8000, scoped, tag = 'input window, operand 1']
    #allocation6 [shape = 's32[2]{0}', space=sflag, size = 0x8, scoped, tag = 'scoped memory for tpu_custom_call.1']
    #allocation7 [shape = 'u8[32768]{0}', space=vmem, size = 0x8000, scoped, tag = 'input window, operand 2']
    #allocation8 [shape = 'u8[8192]{0}', space=vmem, size = 0x2000, scoped, tag = 'input window, operand 3']
    #allocation9 [shape = 's32[2]{0}', space=sflag, size = 0x8, scoped, tag = 'scoped memory for tpu_custom_call.1']
    #allocation10 [shape = 'u8[8192]{0}', space=vmem, size = 0x2000, scoped, tag = 'output window, operand 0']
    %12 = vsyncpa [#allocation3], 0
    %s13 = scalar_lea.sflag [#allocation3], 1
    %14 = vsyncpa %s13, 0
    %15 = vsyncpa [#allocation6], 0
    %s16 = scalar_lea.sflag [#allocation6], 1
    %17 = vsyncpa %s16, 0
    %18 = vsyncpa [#allocation9], 0
    %s19 = scalar_lea.sflag [#allocation9], 1
    %20 = vsyncpa %s19, 0
    %21 = vsyncpa [#allocation4], 0
    %s22 = scalar_lea.sflag [#allocation4], 1
    %23 = vsyncpa %s22, 0
    loop: start=0, step=1, limit=4
    $region2: #{tpu_custom_call.1} parent=1 // loop_pre_header
      _
    $region3: #{tpu_custom_call.1} parent=1 // loop_header
      %s25 = sphi 0, %s29
      %p26 = scmp.ge.s32.totalorder %s25, 4
      %s35 = sphi 0, %s37
      %s38 = sphi 0, %s35
      %s39 = sphi 0, %s38
      %s55 = sphi 0, %s39
      %s61 = sphi 0, %s63
      %s64 = sphi 0, %s61
      %s65 = sphi 0, %s64
      %s81 = sphi 0, %s65
      %s87 = sphi 0, %s89
      %s90 = sphi 0, %s87
      %s91 = sphi 0, %s90
      %s107 = sphi 0, %s91
      %s113 = sphi 0, %s115
      %s116 = sphi 0, %s113
      %s117 = sphi 0, %s116
      %s133 = sphi 0, %s117
      %s137 = sphi 0, %s137
      %s139 = sphi 0, %s137
      %s140 = sphi 0, %s139
      %s154 = sphi 0, %s140
      %s158 = sphi 0, %s158
      %s160 = sphi 0, %s158
      %s161 = sphi 0, %s160
      %s175 = sphi 0, %s161
      %s179 = sphi 0, %s179
      %s181 = sphi 0, %s179
      %s182 = sphi 0, %s181
      %s196 = sphi 0, %s182
      %s202 = sphi 0, %s204
      %s205 = sphi 0, %s202
      %s206 = sphi 0, %s205
      %s222 = sphi 0, %s206
    $region4: #{tpu_custom_call.1} parent=1 // loop_header_branch
      %28 = sbr.rel (%p26) target = $region8
    $region5: #{tpu_custom_call.1} parent=1 // loop_body
      %s30 = ssub.s32 %s25, 1
      %s31 = ssub.s32 %s25, 2
      %s32 = sadd.s32 %s25, 1
      %s33 = ssub.s32 %s25, %s32
      %p34 = scmp.eq.s32.totalorder %s33, 0
      %s36 = sadd.s32 %s35, 1
      %s37 = scalar_select %p34, %s35, %s36
      %p40 = pneg %p34
      %p41 = scmp.eq.s32.totalorder %s25, 1
      %p42 = por %p40, %p41
      %p43 = scmp.ne.s32.totalorder %s35, %s38
      %p44 = scmp.eq.s32.totalorder %s25, 0
      %p45 = por %p43, %p44
      %p46 = scmp.ne.s32.totalorder %s35, %s38
      %p47 = scmp.eq.s32.totalorder %s30, 1
      %p48 = por %p46, %p47
      %p49 = scmp.ne.s32.totalorder %s38, %s39
      %p50 = scmp.eq.s32.totalorder %s30, 0
      %p51 = por %p49, %p50
      %p52 = scmp.ne.s32.totalorder %s38, %s39
      %p53 = scmp.eq.s32.totalorder %s31, 1
      %p54 = por %p52, %p53
      %p56 = scmp.ne.s32.totalorder %s39, %s55
      %p57 = scmp.eq.s32.totalorder %s31, 0
      %p58 = por %p56, %p57
      %s59 = ssub.s32 %s25, %s32
      %p60 = scmp.eq.s32.totalorder %s59, 0
      %s62 = sadd.s32 %s61, 1
      %s63 = scalar_select %p60, %s61, %s62
      %p66 = pneg %p60
      %p67 = scmp.eq.s32.totalorder %s25, 1
      %p68 = por %p66, %p67
      %p69 = scmp.ne.s32.totalorder %s61, %s64
      %p70 = scmp.eq.s32.totalorder %s25, 0
      %p71 = por %p69, %p70
      %p72 = scmp.ne.s32.totalorder %s61, %s64
      %p73 = scmp.eq.s32.totalorder %s30, 1
      %p74 = por %p72, %p73
      %p75 = scmp.ne.s32.totalorder %s64, %s65
      %p76 = scmp.eq.s32.totalorder %s30, 0
      %p77 = por %p75, %p76
      %p78 = scmp.ne.s32.totalorder %s64, %s65
      %p79 = scmp.eq.s32.totalorder %s31, 1
      %p80 = por %p78, %p79
      %p82 = scmp.ne.s32.totalorder %s65, %s81
      %p83 = scmp.eq.s32.totalorder %s31, 0
      %p84 = por %p82, %p83
      %s85 = ssub.s32 %s25, %s32
      %p86 = scmp.eq.s32.totalorder %s85, 0
      %s88 = sadd.s32 %s87, 1
      %s89 = scalar_select %p86, %s87, %s88
      %p92 = pneg %p86
      %p93 = scmp.eq.s32.totalorder %s25, 1
      %p94 = por %p92, %p93
      %p95 = scmp.ne.s32.totalorder %s87, %s90
      %p96 = scmp.eq.s32.totalorder %s25, 0
      %p97 = por %p95, %p96
      %p98 = scmp.ne.s32.totalorder %s87, %s90
      %p99 = scmp.eq.s32.totalorder %s30, 1
      %p100 = por %p98, %p99
      %p101 = scmp.ne.s32.totalorder %s90, %s91
      %p102 = scmp.eq.s32.totalorder %s30, 0
      %p103 = por %p101, %p102
      %p104 = scmp.ne.s32.totalorder %s90, %s91
      %p105 = scmp.eq.s32.totalorder %s31, 1
      %p106 = por %p104, %p105
      %p108 = scmp.ne.s32.totalorder %s91, %s107
      %p109 = scmp.eq.s32.totalorder %s31, 0
      %p110 = por %p108, %p109
      %s111 = ssub.s32 %s25, %s32
      %p112 = scmp.eq.s32.totalorder %s111, 0
      %s114 = sadd.s32 %s113, 1
      %s115 = scalar_select %p112, %s113, %s114
      %p118 = pneg %p112
      %p119 = scmp.eq.s32.totalorder %s25, 1
      %p120 = por %p118, %p119
      %p121 = scmp.ne.s32.totalorder %s113, %s116
      %p122 = scmp.eq.s32.totalorder %s25, 0
      %p123 = por %p121, %p122
      %p124 = scmp.ne.s32.totalorder %s113, %s116
      %p125 = scmp.eq.s32.totalorder %s30, 1
      %p126 = por %p124, %p125
      %p127 = scmp.ne.s32.totalorder %s116, %s117
      %p128 = scmp.eq.s32.totalorder %s30, 0
      %p129 = por %p127, %p128
      %p130 = scmp.ne.s32.totalorder %s116, %s117
      %p131 = scmp.eq.s32.totalorder %s31, 1
      %p132 = por %p130, %p131
      %p134 = scmp.ne.s32.totalorder %s117, %s133
      %p135 = scmp.eq.s32.totalorder %s31, 0
      %p136 = por %p134, %p135
      %s138 = sadd.s32 %s137, 1
      %p141 = scmp.eq.s32.totalorder %s25, 1
      %p142 = scmp.ne.s32.totalorder %s137, %s139
      %p143 = scmp.eq.s32.totalorder %s25, 0
      %p144 = por %p142, %p143
      %p145 = scmp.ne.s32.totalorder %s137, %s139
      %p146 = scmp.eq.s32.totalorder %s30, 1
      %p147 = por %p145, %p146
      %p148 = scmp.ne.s32.totalorder %s139, %s140
      %p149 = scmp.eq.s32.totalorder %s30, 0
      %p150 = por %p148, %p149
      %p151 = scmp.ne.s32.totalorder %s139, %s140
      %p152 = scmp.eq.s32.totalorder %s31, 1
      %p153 = por %p151, %p152
      %p155 = scmp.ne.s32.totalorder %s140, %s154
      %p156 = scmp.eq.s32.totalorder %s31, 0
      %p157 = por %p155, %p156
      %s159 = sadd.s32 %s158, 1
      %p162 = scmp.eq.s32.totalorder %s25, 1
      %p163 = scmp.ne.s32.totalorder %s158, %s160
      %p164 = scmp.eq.s32.totalorder %s25, 0
      %p165 = por %p163, %p164
      %p166 = scmp.ne.s32.totalorder %s158, %s160
      %p167 = scmp.eq.s32.totalorder %s30, 1
      %p168 = por %p166, %p167
      %p169 = scmp.ne.s32.totalorder %s160, %s161
      %p170 = scmp.eq.s32.totalorder %s30, 0
      %p171 = por %p169, %p170
      %p172 = scmp.ne.s32.totalorder %s160, %s161
      %p173 = scmp.eq.s32.totalorder %s31, 1
      %p174 = por %p172, %p173
      %p176 = scmp.ne.s32.totalorder %s161, %s175
      %p177 = scmp.eq.s32.totalorder %s31, 0
      %p178 = por %p176, %p177
      %s180 = sadd.s32 %s179, 1
      %p183 = scmp.eq.s32.totalorder %s25, 1
      %p184 = scmp.ne.s32.totalorder %s179, %s181
      %p185 = scmp.eq.s32.totalorder %s25, 0
      %p186 = por %p184, %p185
      %p187 = scmp.ne.s32.totalorder %s179, %s181
      %p188 = scmp.eq.s32.totalorder %s30, 1
      %p189 = por %p187, %p188
      %p190 = scmp.ne.s32.totalorder %s181, %s182
      %p191 = scmp.eq.s32.totalorder %s30, 0
      %p192 = por %p190, %p191
      %p193 = scmp.ne.s32.totalorder %s181, %s182
      %p194 = scmp.eq.s32.totalorder %s31, 1
      %p195 = por %p193, %p194
      %p197 = scmp.ne.s32.totalorder %s182, %s196
      %p198 = scmp.eq.s32.totalorder %s31, 0
      %p199 = por %p197, %p198
      %s200 = ssub.s32 %s25, %s32
      %p201 = scmp.eq.s32.totalorder %s200, 0
      %s203 = sadd.s32 %s202, 1
      %s204 = scalar_select %p201, %s202, %s203
      %p207 = pneg %p201
      %p208 = scmp.eq.s32.totalorder %s25, 1
      %p209 = por %p207, %p208
      %p210 = scmp.ne.s32.totalorder %s202, %s205
      %p211 = scmp.eq.s32.totalorder %s25, 0
      %p212 = por %p210, %p211
      %p213 = scmp.ne.s32.totalorder %s202, %s205
      %p214 = scmp.eq.s32.totalorder %s30, 1
      %p215 = por %p213, %p214
      %p216 = scmp.ne.s32.totalorder %s205, %s206
      %p217 = scmp.eq.s32.totalorder %s30, 0
      %p218 = por %p216, %p217
      %p219 = scmp.ne.s32.totalorder %s205, %s206
      %p220 = scmp.eq.s32.totalorder %s31, 1
      %p221 = por %p219, %p220
      %p223 = scmp.ne.s32.totalorder %s206, %s222
      %p224 = scmp.eq.s32.totalorder %s31, 0
      %p225 = por %p223, %p224
      %p226 = scmp.le.s32.totalorder 1, %s25
      %p227 = scmp.lt.s32.totalorder %s25, 3
      %p228 = pnand %p226, %p227
      %p229 = pneg %p228
      // Predicated region
      $region9: #{tpu_custom_call.1} parent=5 // pred_check
        _
      $region10: #{tpu_custom_call.1} parent=5 // pred_check_branch
        %231 = sbr.rel (%p228) target = $region12
      $region11: #{tpu_custom_call.1} parent=5 // pred_region
        %s232 = ssub.s32 %s25, 1
        // Predicated region
        $region13: #{tpu_custom_call.1} parent=11 // pred_check
          %p233 = pneg %p150
        $region14: #{tpu_custom_call.1} parent=11 // pred_check_branch
          %235 = sbr.rel (%p233) target = $region16
        $region15: #{tpu_custom_call.1} parent=11 // pred_region
          _
        $region16: #{tpu_custom_call.1} parent=11 // pred_fallthru
          _
        // Predicated region
        $region17: #{tpu_custom_call.1} parent=11 // pred_check
          %p236 = pneg %p171
        $region18: #{tpu_custom_call.1} parent=11 // pred_check_branch
          %238 = sbr.rel (%p236) target = $region20
        $region19: #{tpu_custom_call.1} parent=11 // pred_region
          _
        $region20: #{tpu_custom_call.1} parent=11 // pred_fallthru
          _
        // Predicated region
        $region21: #{tpu_custom_call.1} parent=11 // pred_check
          %p239 = pneg %p192
        $region22: #{tpu_custom_call.1} parent=11 // pred_check_branch
          %241 = sbr.rel (%p239) target = $region24
        $region23: #{tpu_custom_call.1} parent=11 // pred_region
          _
        $region24: #{tpu_custom_call.1} parent=11 // pred_fallthru
          _
      $region12: #{tpu_custom_call.1} parent=5 // pred_fallthru
        _
      %p242 = scmp.lt.s32.totalorder %s25, 2
      // Predicated region
      $region25: #{tpu_custom_call.1} parent=5 // pred_check
        %p243 = pneg %p242
      $region26: #{tpu_custom_call.1} parent=5 // pred_check_branch
        %245 = sbr.rel (%p243) target = $region28
      $region27: #{tpu_custom_call.1} parent=5 // pred_region
        // Predicated region
        $region29: #{tpu_custom_call.1} parent=27 // pred_check
          %p246 = pneg %p45
        $region30: #{tpu_custom_call.1} parent=27 // pred_check_branch
          %248 = sbr.rel (%p246) target = $region32
        $region31: #{tpu_custom_call.1} parent=27 // pred_region
          %s249 = sand.u32 %s35, 1
          %s250 = scalar_lea.sflag [#allocation3], %s249
          %s251 = sand.u32 %s35, 1
          %s252 = smul.addr %s251, 32
          %s253 = scalar_lea.vmem [#allocation2], %s252
          %255 = vsyncadd %s250, 0
          %s256 = smul.addr %s25, 4
          %s257 = smul.addr %s256, 8
          %s258 = scalar_lea.hbm %s0, %s257
          %s259 = sshll.u32 %s258, 4
          %s260 = int_to_ptr.hbm [resolvable:$true] %s259
          %s261 = sshll.u32 %s253, 4
          %s262 = int_to_ptr.vmem [resolvable:$true] %s261
          %267 = dma.hbm_to_vmem [thread:$0]  %s260, 512, %s262, %s250, 128, 128, 8
        $region32: #{tpu_custom_call.1} parent=27 // pred_fallthru
          _
        // Predicated region
        $region33: #{tpu_custom_call.1} parent=27 // pred_check
          %p268 = pneg %p71
        $region34: #{tpu_custom_call.1} parent=27 // pred_check_branch
          %270 = sbr.rel (%p268) target = $region36
        $region35: #{tpu_custom_call.1} parent=27 // pred_region
          %s271 = sand.u32 %s25, 1
          %s272 = scalar_lea.sflag [#allocation6], %s271
          %s273 = sand.u32 %s61, 1
          %s274 = smul.addr %s273, 32
          %s275 = scalar_lea.vmem [#allocation5], %s274
          %277 = vsyncadd %s272, 0
          %s278 = smul.addr %s25, 4
          %s279 = smul.addr %s278, 8
          %s280 = scalar_lea.hbm %s1, %s279
          %s281 = sshll.u32 %s280, 4
          %s282 = int_to_ptr.hbm [resolvable:$true] %s281
          %s283 = sshll.u32 %s275, 4
          %s284 = int_to_ptr.vmem [resolvable:$true] %s283
          %289 = dma.hbm_to_vmem [thread:$0]  %s282, 512, %s284, %s272, 128, 128, 8
        $region36: #{tpu_custom_call.1} parent=27 // pred_fallthru
          _
        // Predicated region
        $region37: #{tpu_custom_call.1} parent=27 // pred_check
          %p290 = pneg %p97
        $region38: #{tpu_custom_call.1} parent=27 // pred_check_branch
          %292 = sbr.rel (%p290) target = $region40
        $region39: #{tpu_custom_call.1} parent=27 // pred_region
          %s293 = sand.u32 %s25, 1
          %s294 = scalar_lea.sflag [#allocation6], %s293
          %s295 = sand.u32 %s87, 1
          %s296 = smul.addr %s295, 32
          %s297 = scalar_lea.vmem [#allocation7], %s296
          %299 = vsyncadd %s294, 0
          %s300 = smul.addr %s25, 4
          %s301 = smul.addr %s300, 8
          %s302 = scalar_lea.hbm %s2, %s301
          %s303 = sshll.u32 %s302, 4
          %s304 = int_to_ptr.hbm [resolvable:$true] %s303
          %s305 = sshll.u32 %s297, 4
          %s306 = int_to_ptr.vmem [resolvable:$true] %s305
          %311 = dma.hbm_to_vmem [thread:$0]  %s304, 512, %s306, %s294, 128, 128, 8
        $region40: #{tpu_custom_call.1} parent=27 // pred_fallthru
          _
        // Predicated region
        $region41: #{tpu_custom_call.1} parent=27 // pred_check
          %p312 = pneg %p123
        $region42: #{tpu_custom_call.1} parent=27 // pred_check_branch
          %314 = sbr.rel (%p312) target = $region44
        $region43: #{tpu_custom_call.1} parent=27 // pred_region
          %s315 = sand.u32 %s113, 1
          %s316 = scalar_lea.sflag [#allocation9], %s315
          %s317 = sand.u32 %s113, 1
          %s318 = smul.addr %s317, 8
          %s319 = scalar_lea.vmem [#allocation8], %s318
          %321 = vsyncadd %s316, 0
          %s322 = smul.addr %s25, 8
          %s323 = scalar_lea.hbm %s3, %s322
          %s325 = sshll.u32 %s323, 4
          %s326 = int_to_ptr.hbm [resolvable:$true] %s325
          %s327 = sshll.u32 %s319, 4
          %s328 = int_to_ptr.vmem [resolvable:$true] %s327
          %330 = dma.hbm_to_vmem [thread:$0]  %s326, 128, %s328, %s316
        $region44: #{tpu_custom_call.1} parent=27 // pred_fallthru
          _
      $region28: #{tpu_custom_call.1} parent=5 // pred_fallthru
        _
      %p331 = scmp.le.s32.totalorder 1, %s25
      %p332 = scmp.lt.s32.totalorder %s25, 3
      %p333 = pnand %p331, %p332
      %p334 = pneg %p333
      // Predicated region
      $region45: #{tpu_custom_call.1} parent=5 // pred_check
        _
      $region46: #{tpu_custom_call.1} parent=5 // pred_check_branch
        %336 = sbr.rel (%p333) target = $region48
      $region47: #{tpu_custom_call.1} parent=5 // pred_region
        %s337 = ssub.s32 %s25, 1
        %s338 = sand.u32 %s38, 1
        %s339 = scalar_lea.sflag [#allocation3], %s338
        %s340 = sand.u32 %s38, 1
        %s341 = smul.addr %s340, 32
        %s342 = scalar_lea.vmem [#allocation2], %s341
        // Predicated region
        $region49: #{tpu_custom_call.1} parent=47 // pred_check
          %p343 = pneg %p51
        $region50: #{tpu_custom_call.1} parent=47 // pred_check_branch
          %345 = sbr.rel (%p343) target = $region52
        $region51: #{tpu_custom_call.1} parent=47 // pred_region
          %347 = dma.done %s339, 512
        $region52: #{tpu_custom_call.1} parent=47 // pred_fallthru
          _
        %s348 = sand.u32 %s30, 1
        %s349 = scalar_lea.sflag [#allocation6], %s348
        %s350 = sand.u32 %s64, 1
        %s351 = smul.addr %s350, 32
        %s352 = scalar_lea.vmem [#allocation5], %s351
        // Predicated region
        $region53: #{tpu_custom_call.1} parent=47 // pred_check
          %p353 = pneg %p77
        $region54: #{tpu_custom_call.1} parent=47 // pred_check_branch
          %355 = sbr.rel (%p353) target = $region56
        $region55: #{tpu_custom_call.1} parent=47 // pred_region
          %357 = dma.done %s349, 512
        $region56: #{tpu_custom_call.1} parent=47 // pred_fallthru
          _
        %s358 = sand.u32 %s30, 1
        %s359 = scalar_lea.sflag [#allocation6], %s358
        %s360 = sand.u32 %s90, 1
        %s361 = smul.addr %s360, 32
        %s362 = scalar_lea.vmem [#allocation7], %s361
        // Predicated region
        $region57: #{tpu_custom_call.1} parent=47 // pred_check
          %p363 = pneg %p103
        $region58: #{tpu_custom_call.1} parent=47 // pred_check_branch
          %365 = sbr.rel (%p363) target = $region60
        $region59: #{tpu_custom_call.1} parent=47 // pred_region
          %367 = dma.done %s359, 512
        $region60: #{tpu_custom_call.1} parent=47 // pred_fallthru
          _
        %s368 = sand.u32 %s116, 1
        %s369 = scalar_lea.sflag [#allocation9], %s368
        %s370 = sand.u32 %s116, 1
        %s371 = smul.addr %s370, 8
        %s372 = scalar_lea.vmem [#allocation8], %s371
        // Predicated region
        $region61: #{tpu_custom_call.1} parent=47 // pred_check
          %p373 = pneg %p129
        $region62: #{tpu_custom_call.1} parent=47 // pred_check_branch
          %375 = sbr.rel (%p373) target = $region64
        $region63: #{tpu_custom_call.1} parent=47 // pred_region
          %377 = dma.done %s369, 128
        $region64: #{tpu_custom_call.1} parent=47 // pred_fallthru
          _
        %s378 = sand.u32 %s38, 1
        %s379 = scalar_lea.sflag [#allocation3], %s378
        %s380 = sand.u32 %s38, 1
        %s381 = smul.addr %s380, 32
        %s382 = scalar_lea.vmem [#allocation2], %s381
        %p383 = pneg %p51
        %p384 = pneg %p48
        %s385 = sand.u32 %s30, 1
        %s386 = scalar_lea.sflag [#allocation6], %s385
        %s387 = sand.u32 %s64, 1
        %s388 = smul.addr %s387, 32
        %s389 = scalar_lea.vmem [#allocation5], %s388
        %p390 = pneg %p77
        %p391 = pneg %p74
        %s392 = sand.u32 %s30, 1
        %s393 = scalar_lea.sflag [#allocation6], %s392
        %s394 = sand.u32 %s90, 1
        %s395 = smul.addr %s394, 32
        %s396 = scalar_lea.vmem [#allocation7], %s395
        %p397 = pneg %p103
        %p398 = pneg %p100
        %s399 = sand.u32 %s116, 1
        %s400 = scalar_lea.sflag [#allocation9], %s399
        %s401 = sand.u32 %s116, 1
        %s402 = smul.addr %s401, 8
        %s403 = scalar_lea.vmem [#allocation8], %s402
        %p404 = pneg %p129
        %p405 = pneg %p126
        %p406 = pneg %p150
        %p407 = pneg %p147
        %p408 = pneg %p171
        %p409 = pneg %p168
        %p410 = pneg %p192
        %p411 = pneg %p189
        %p412 = pneg %p218
        %p413 = pneg %p215
        %s414 = sand.u32 %s205, 1
        %s415 = scalar_lea.sflag [#allocation4], %s414
        %s416 = sand.u32 %s205, 1
        %s417 = smul.addr %s416, 8
        %s418 = scalar_lea.vmem [#allocation10], %s417
        %v419 = vld [vmem:[%s362] sm:$0xff]
        %v420 = vld [vmem:[%s362 + $0x8] sm:$0xff]
        %v421 = vld [vmem:[%s362 + $0x10] sm:$0xff]
        %v422 = vld [vmem:[%s362 + $0x18] sm:$0xff]
        %v423 = vld [vmem:[%s352] sm:$0xff]
        %v424 = vld [vmem:[%s352 + $0x8] sm:$0xff]
        %v425 = vld [vmem:[%s352 + $0x10] sm:$0xff]
        %v426 = vld [vmem:[%s352 + $0x18] sm:$0xff]
        %v427 = vld [vmem:[%s342] sm:$0xff]
        %v428 = vld [vmem:[%s342 + $0x8] sm:$0xff]
        %v429 = vld [vmem:[%s342 + $0x10] sm:$0xff]
        %v430 = vld [vmem:[%s342 + $0x18] sm:$0xff]
        %v431 = vld [vmem:[%s372] sm:$0xff]
        %v432 = vld [vmem:[%s4] sm:$0xff]
        %v433 = vld [vmem:[%s4 + $0x8] sm:$0xff]
        %v434 = vld [vmem:[%s4 + $0x10] sm:$0xff]
        %vm435 = vcmask 64512
        %v437 = vsel %vm435, %v419, 0
        %v440 = vsel %vm435, %v420, 0
        %v443 = vsel %vm435, %v421, 0
        %v446 = vsel %vm435, %v422, 0
        %448 = vmatpush.msra.mxu0 0.0
        %449 = vmatpush.msra.mxu0 0.0
        %450 = vmatpush.msra.mxu0 0.0
        %451 = vmatpush.msra.mxu0 0.0
        %452 = vmatpush.msra.mxu0 0.0
        %453 = vmatpush.msra.mxu0 0.0
        %454 = vmatpush.msra.mxu0 0.0
        %455 = vmatpush.msra.mxu0 0.0
        %456 = vmatpush.msra.mxu0 0.0
        %457 = vmatpush.msra.mxu0 0.0
        %458 = vmatpush.msra.mxu0 0.0
        %459 = vmatpush.msra.mxu0 0.0
        %460 = vmatpush.msra.mxu0 0.0
        %461 = vmatpush.msra.mxu0 0.0
        %462 = vmatpush.msra.mxu0 0.0
        %463 = vmatpush.msra.mxu0 %v432
        %464 = vmatmul.f32.gmra.mxu0 %v437
        %v465 = vpop.f32.mrf.mxu0
        %v466 = vadd.f32 0.0, %v465
        %467 = vmatmul.f32.gmra.mxu0 %v440
        %v468 = vpop.f32.mrf.mxu0
        %v469 = vadd.f32 0.0, %v468
        %470 = vmatmul.f32.gmra.mxu0 %v443
        %v471 = vpop.f32.mrf.mxu0
        %v472 = vadd.f32 0.0, %v471
        %473 = vmatmul.f32.gmra.mxu0 %v446
        %v474 = vpop.f32.mrf.mxu0
        %v475 = vadd.f32 0.0, %v474
        %476 = vdwg.mxu0
        %v478 = vsel %vm435, %v423, 0
        %v481 = vsel %vm435, %v424, 0
        %v484 = vsel %vm435, %v425, 0
        %v487 = vsel %vm435, %v426, 0
        %489 = vmatpush.msra.mxu0 0.0
        %490 = vmatpush.msra.mxu0 0.0
        %491 = vmatpush.msra.mxu0 0.0
        %492 = vmatpush.msra.mxu0 0.0
        %493 = vmatpush.msra.mxu0 0.0
        %494 = vmatpush.msra.mxu0 0.0
        %495 = vmatpush.msra.mxu0 0.0
        %496 = vmatpush.msra.mxu0 0.0
        %497 = vmatpush.msra.mxu0 0.0
        %498 = vmatpush.msra.mxu0 0.0
        %499 = vmatpush.msra.mxu0 0.0
        %500 = vmatpush.msra.mxu0 0.0
        %501 = vmatpush.msra.mxu0 0.0
        %502 = vmatpush.msra.mxu0 0.0
        %503 = vmatpush.msra.mxu0 0.0
        %504 = vmatpush.msra.mxu0 %v433
        %505 = vmatmul.f32.gmra.mxu0 %v478
        %v506 = vpop.f32.mrf.mxu0
        %v507 = vadd.f32 0.0, %v506
        %508 = vmatmul.f32.gmra.mxu0 %v481
        %v509 = vpop.f32.mrf.mxu0
        %v510 = vadd.f32 0.0, %v509
        %511 = vmatmul.f32.gmra.mxu0 %v484
        %v512 = vpop.f32.mrf.mxu0
        %v513 = vadd.f32 0.0, %v512
        %514 = vmatmul.f32.gmra.mxu0 %v487
        %v515 = vpop.f32.mrf.mxu0
        %v516 = vadd.f32 0.0, %v515
        %517 = vdwg.mxu0
        %v519 = vsel %vm435, %v427, 0
        %v522 = vsel %vm435, %v428, 0
        %v525 = vsel %vm435, %v429, 0
        %v528 = vsel %vm435, %v430, 0
        %530 = vmatpush.msra.mxu0 0.0
        %531 = vmatpush.msra.mxu0 0.0
        %532 = vmatpush.msra.mxu0 0.0
        %533 = vmatpush.msra.mxu0 0.0
        %534 = vmatpush.msra.mxu0 0.0
        %535 = vmatpush.msra.mxu0 0.0
        %536 = vmatpush.msra.mxu0 0.0
        %537 = vmatpush.msra.mxu0 0.0
        %538 = vmatpush.msra.mxu0 0.0
        %539 = vmatpush.msra.mxu0 0.0
        %540 = vmatpush.msra.mxu0 0.0
        %541 = vmatpush.msra.mxu0 0.0
        %542 = vmatpush.msra.mxu0 0.0
        %543 = vmatpush.msra.mxu0 0.0
        %544 = vmatpush.msra.mxu0 0.0
        %545 = vmatpush.msra.mxu0 %v434
        %546 = vmatmul.f32.gmra.mxu0 %v519
        %v547 = vpop.f32.mrf.mxu0
        %v548 = vadd.f32 0.0, %v547
        %549 = vmatmul.f32.gmra.mxu0 %v522
        %v550 = vpop.f32.mrf.mxu0
        %v551 = vadd.f32 0.0, %v550
        %552 = vmatmul.f32.gmra.mxu0 %v525
        %v553 = vpop.f32.mrf.mxu0
        %v554 = vadd.f32 0.0, %v553
        %555 = vmatmul.f32.gmra.mxu0 %v528
        %v556 = vpop.f32.mrf.mxu0
        %v557 = vadd.f32 0.0, %v556
        %558 = vdwg.mxu0
        %v560 = vsel %vm435, %v466, 0
        %v563 = vsel %vm435, %v507, 0
        %565 = vmatpush.xpose.msra.mxu0 0.0
        %566 = vmatpush.xpose.msra.mxu0 0.0
        %567 = vmatpush.xpose.msra.mxu0 0.0
        %568 = vmatpush.xpose.msra.mxu0 0.0
        %569 = vmatpush.xpose.msra.mxu0 0.0
        %570 = vmatpush.xpose.msra.mxu0 0.0
        %571 = vmatpush.xpose.msra.mxu0 0.0
        %572 = vmatpush.xpose.msra.mxu0 0.0
        %573 = vmatpush.xpose.msra.mxu0 0.0
        %574 = vmatpush.xpose.msra.mxu0 0.0
        %575 = vmatpush.xpose.msra.mxu0 0.0
        %576 = vmatpush.xpose.msra.mxu0 0.0
        %577 = vmatpush.xpose.msra.mxu0 0.0
        %578 = vmatpush.xpose.msra.mxu0 0.0
        %579 = vmatpush.xpose.msra.mxu0 0.0
        %580 = vmatpush.xpose.msra.mxu0 %v563
        %581 = vmatmul.f32.gmra.mxu0 %v560
        %v582 = vpop.f32.mrf.mxu0
        %v583 = vadd.f32 %v431, %v582
        %584 = vdwg.mxu0
        %v586 = vsel %vm435, %v469, 0
        %v589 = vsel %vm435, %v510, 0
        %591 = vmatpush.xpose.msra.mxu0 0.0
        %592 = vmatpush.xpose.msra.mxu0 0.0
        %593 = vmatpush.xpose.msra.mxu0 0.0
        %594 = vmatpush.xpose.msra.mxu0 0.0
        %595 = vmatpush.xpose.msra.mxu0 0.0
        %596 = vmatpush.xpose.msra.mxu0 0.0
        %597 = vmatpush.xpose.msra.mxu0 0.0
        %598 = vmatpush.xpose.msra.mxu0 0.0
        %599 = vmatpush.xpose.msra.mxu0 0.0
        %600 = vmatpush.xpose.msra.mxu0 0.0
        %601 = vmatpush.xpose.msra.mxu0 0.0
        %602 = vmatpush.xpose.msra.mxu0 0.0
        %603 = vmatpush.xpose.msra.mxu0 0.0
        %604 = vmatpush.xpose.msra.mxu0 0.0
        %605 = vmatpush.xpose.msra.mxu0 0.0
        %606 = vmatpush.xpose.msra.mxu0 %v589
        %607 = vmatmul.f32.gmra.mxu0 %v586
        %v608 = vpop.f32.mrf.mxu0
        %v609 = vadd.f32 %v431, %v608
        %610 = vdwg.mxu0
        %v612 = vsel %vm435, %v472, 0
        %v615 = vsel %vm435, %v513, 0
        %617 = vmatpush.xpose.msra.mxu0 0.0
        %618 = vmatpush.xpose.msra.mxu0 0.0
        %619 = vmatpush.xpose.msra.mxu0 0.0
        %620 = vmatpush.xpose.msra.mxu0 0.0
        %621 = vmatpush.xpose.msra.mxu0 0.0
        %622 = vmatpush.xpose.msra.mxu0 0.0
        %623 = vmatpush.xpose.msra.mxu0 0.0
        %624 = vmatpush.xpose.msra.mxu0 0.0
        %625 = vmatpush.xpose.msra.mxu0 0.0
        %626 = vmatpush.xpose.msra.mxu0 0.0
        %627 = vmatpush.xpose.msra.mxu0 0.0
        %628 = vmatpush.xpose.msra.mxu0 0.0
        %629 = vmatpush.xpose.msra.mxu0 0.0
        %630 = vmatpush.xpose.msra.mxu0 0.0
        %631 = vmatpush.xpose.msra.mxu0 0.0
        %632 = vmatpush.xpose.msra.mxu0 %v615
        %633 = vmatmul.f32.gmra.mxu0 %v612
        %v634 = vpop.f32.mrf.mxu0
        %v635 = vadd.f32 %v431, %v634
        %636 = vdwg.mxu0
        %v638 = vsel %vm435, %v475, 0
        %v641 = vsel %vm435, %v516, 0
        %643 = vmatpush.xpose.msra.mxu0 0.0
        %644 = vmatpush.xpose.msra.mxu0 0.0
        %645 = vmatpush.xpose.msra.mxu0 0.0
        %646 = vmatpush.xpose.msra.mxu0 0.0
        %647 = vmatpush.xpose.msra.mxu0 0.0
        %648 = vmatpush.xpose.msra.mxu0 0.0
        %649 = vmatpush.xpose.msra.mxu0 0.0
        %650 = vmatpush.xpose.msra.mxu0 0.0
        %651 = vmatpush.xpose.msra.mxu0 0.0
        %652 = vmatpush.xpose.msra.mxu0 0.0
        %653 = vmatpush.xpose.msra.mxu0 0.0
        %654 = vmatpush.xpose.msra.mxu0 0.0
        %655 = vmatpush.xpose.msra.mxu0 0.0
        %656 = vmatpush.xpose.msra.mxu0 0.0
        %657 = vmatpush.xpose.msra.mxu0 0.0
        %658 = vmatpush.xpose.msra.mxu0 %v641
        %659 = vmatmul.f32.gmra.mxu0 %v638
        %v660 = vpop.f32.mrf.mxu0
        %v661 = vadd.f32 %v431, %v660
        %662 = vdwg.mxu0
        %v663 = vmul.f32 %v583, 0.17677669
        %v664 = vmul.f32 %v609, 0.17677669
        %v665 = vmul.f32 %v635, 0.17677669
        %v666 = vmul.f32 %v661, 0.17677669
        %v667 = vsel %vm435, %v663, -inf
        %668 = vmax.xlane.f32.xlu0 %v667
        %v669 = vpop.xlane.xlu0 %668
        %v670 = vsel %vm435, %v664, -inf
        %671 = vmax.xlane.f32.xlu0 %v670
        %v672 = vpop.xlane.xlu0 %671
        %v673 = vsel %vm435, %v665, -inf
        %674 = vmax.xlane.f32.xlu0 %v673
        %v675 = vpop.xlane.xlu0 %674
        %v676 = vsel %vm435, %v666, -inf
        %677 = vmax.xlane.f32.xlu0 %v676
        %v678 = vpop.xlane.xlu0 %677
        %v679 = vsub.f32 %v663, %v669
        %v680 = vsub.f32 %v664, %v672
        %v681 = vsub.f32 %v665, %v675
        %v682 = vsub.f32 %v666, %v678
        %v683 = vmul.f32 %v679, 1.442695
        %v684 = vpow.pop %v683
        %v685 = vmul.f32 %v680, 1.442695
        %v686 = vpow.pop %v685
        %v687 = vmul.f32 %v681, 1.442695
        %v688 = vpow.pop %v687
        %v689 = vmul.f32 %v682, 1.442695
        %v690 = vpow.pop %v689
        %v691 = vsel %vm435, %v684, 0.0
        %692 = vadd.xlane.f32.xlu0 %v691
        %v693 = vpop.xlane.xlu0 %692
        %v694 = vsel %vm435, %v686, 0.0
        %695 = vadd.xlane.f32.xlu0 %v694
        %v696 = vpop.xlane.xlu0 %695
        %v697 = vsel %vm435, %v688, 0.0
        %698 = vadd.xlane.f32.xlu0 %v697
        %v699 = vpop.xlane.xlu0 %698
        %v700 = vsel %vm435, %v690, 0.0
        %701 = vadd.xlane.f32.xlu0 %v700
        %v702 = vpop.xlane.xlu0 %701
        %v703 = vrcp.pop %v693
        %v704 = vmul.f32 %v693, %v703
        %v705 = vsub.f32 1.0, %v704
        %v706 = vmul.f32 %v703, %v705
        %v707 = vadd.f32 %v703, %v706
        %vm708 = vweird.f32 %v693
        %vm709 = vweird.f32 %v703
        %vm710 = vmor %vm708, %vm709
        %v711 = vsel %vm710, %v703, %v707
        %v712 = vand.u32 2147483647, %v693
        %vm713 = vcmp.eq.f32.partialorder %v712, 8.507059e+37
        %v714 = vand.u32 %v693, 2147483648
        %v715 = vor.u32 1.1754944e-38, %v714
        %v716 = vsel %vm713, %v715, %v711
        %v717 = vmul.f32 %v684, %v716
        %v718 = vrcp.pop %v696
        %v719 = vmul.f32 %v696, %v718
        %v720 = vsub.f32 1.0, %v719
        %v721 = vmul.f32 %v718, %v720
        %v722 = vadd.f32 %v718, %v721
        %vm723 = vweird.f32 %v696
        %vm724 = vweird.f32 %v718
        %vm725 = vmor %vm723, %vm724
        %v726 = vsel %vm725, %v718, %v722
        %v727 = vand.u32 2147483647, %v696
        %vm728 = vcmp.eq.f32.partialorder %v727, 8.507059e+37
        %v729 = vand.u32 %v696, 2147483648
        %v730 = vor.u32 1.1754944e-38, %v729
        %v731 = vsel %vm728, %v730, %v726
        %v732 = vmul.f32 %v686, %v731
        %v733 = vrcp.pop %v699
        %v734 = vmul.f32 %v699, %v733
        %v735 = vsub.f32 1.0, %v734
        %v736 = vmul.f32 %v733, %v735
        %v737 = vadd.f32 %v733, %v736
        %vm738 = vweird.f32 %v699
        %vm739 = vweird.f32 %v733
        %vm740 = vmor %vm738, %vm739
        %v741 = vsel %vm740, %v733, %v737
        %v742 = vand.u32 2147483647, %v699
        %vm743 = vcmp.eq.f32.partialorder %v742, 8.507059e+37
        %v744 = vand.u32 %v699, 2147483648
        %v745 = vor.u32 1.1754944e-38, %v744
        %v746 = vsel %vm743, %v745, %v741
        %v747 = vmul.f32 %v688, %v746
        %v748 = vrcp.pop %v702
        %v749 = vmul.f32 %v702, %v748
        %v750 = vsub.f32 1.0, %v749
        %v751 = vmul.f32 %v748, %v750
        %v752 = vadd.f32 %v748, %v751
        %vm753 = vweird.f32 %v702
        %vm754 = vweird.f32 %v748
        %vm755 = vmor %vm753, %vm754
        %v756 = vsel %vm755, %v748, %v752
        %v757 = vand.u32 2147483647, %v702
        %vm758 = vcmp.eq.f32.partialorder %v757, 8.507059e+37
        %v759 = vand.u32 %v702, 2147483648
        %v760 = vor.u32 1.1754944e-38, %v759
        %v761 = vsel %vm758, %v760, %v756
        %v762 = vmul.f32 %v690, %v761
        %v764 = vsel %vm435, %v717, 0
        %766 = vmatpush.msra.mxu0 0.0
        %767 = vmatpush.msra.mxu0 0.0
        %768 = vmatpush.msra.mxu0 0.0
        %769 = vmatpush.msra.mxu0 0.0
        %770 = vmatpush.msra.mxu0 0.0
        %771 = vmatpush.msra.mxu0 0.0
        %772 = vmatpush.msra.mxu0 0.0
        %773 = vmatpush.msra.mxu0 0.0
        %774 = vmatpush.msra.mxu0 0.0
        %775 = vmatpush.msra.mxu0 0.0
        %776 = vmatpush.msra.mxu0 0.0
        %777 = vmatpush.msra.mxu0 0.0
        %778 = vmatpush.msra.mxu0 0.0
        %779 = vmatpush.msra.mxu0 0.0
        %780 = vmatpush.msra.mxu0 0.0
        %781 = vmatpush.msra.mxu0 %v548
        %782 = vmatmul.f32.gmra.mxu0 %v764
        %v783 = vpop.f32.mrf.mxu0
        %v784 = vadd.f32 0.0, %v783
        %785 = vdwg.mxu0
        %v787 = vsel %vm435, %v732, 0
        %789 = vmatpush.msra.mxu0 0.0
        %790 = vmatpush.msra.mxu0 0.0
        %791 = vmatpush.msra.mxu0 0.0
        %792 = vmatpush.msra.mxu0 0.0
        %793 = vmatpush.msra.mxu0 0.0
        %794 = vmatpush.msra.mxu0 0.0
        %795 = vmatpush.msra.mxu0 0.0
        %796 = vmatpush.msra.mxu0 0.0
        %797 = vmatpush.msra.mxu0 0.0
        %798 = vmatpush.msra.mxu0 0.0
        %799 = vmatpush.msra.mxu0 0.0
        %800 = vmatpush.msra.mxu0 0.0
        %801 = vmatpush.msra.mxu0 0.0
        %802 = vmatpush.msra.mxu0 0.0
        %803 = vmatpush.msra.mxu0 0.0
        %804 = vmatpush.msra.mxu0 %v551
        %805 = vmatmul.f32.gmra.mxu0 %v787
        %v806 = vpop.f32.mrf.mxu0
        %v807 = vadd.f32 0.0, %v806
        %808 = vdwg.mxu0
        %v810 = vsel %vm435, %v747, 0
        %812 = vmatpush.msra.mxu0 0.0
        %813 = vmatpush.msra.mxu0 0.0
        %814 = vmatpush.msra.mxu0 0.0
        %815 = vmatpush.msra.mxu0 0.0
        %816 = vmatpush.msra.mxu0 0.0
        %817 = vmatpush.msra.mxu0 0.0
        %818 = vmatpush.msra.mxu0 0.0
        %819 = vmatpush.msra.mxu0 0.0
        %820 = vmatpush.msra.mxu0 0.0
        %821 = vmatpush.msra.mxu0 0.0
        %822 = vmatpush.msra.mxu0 0.0
        %823 = vmatpush.msra.mxu0 0.0
        %824 = vmatpush.msra.mxu0 0.0
        %825 = vmatpush.msra.mxu0 0.0
        %826 = vmatpush.msra.mxu0 0.0
        %827 = vmatpush.msra.mxu0 %v554
        %828 = vmatmul.f32.gmra.mxu0 %v810
        %v829 = vpop.f32.mrf.mxu0
        %v830 = vadd.f32 0.0, %v829
        %831 = vdwg.mxu0
        %v833 = vsel %vm435, %v762, 0
        %835 = vmatpush.msra.mxu0 0.0
        %836 = vmatpush.msra.mxu0 0.0
        %837 = vmatpush.msra.mxu0 0.0
        %838 = vmatpush.msra.mxu0 0.0
        %839 = vmatpush.msra.mxu0 0.0
        %840 = vmatpush.msra.mxu0 0.0
        %841 = vmatpush.msra.mxu0 0.0
        %842 = vmatpush.msra.mxu0 0.0
        %843 = vmatpush.msra.mxu0 0.0
        %844 = vmatpush.msra.mxu0 0.0
        %845 = vmatpush.msra.mxu0 0.0
        %846 = vmatpush.msra.mxu0 0.0
        %847 = vmatpush.msra.mxu0 0.0
        %848 = vmatpush.msra.mxu0 0.0
        %849 = vmatpush.msra.mxu0 0.0
        %850 = vmatpush.msra.mxu0 %v557
        %851 = vmatmul.f32.gmra.mxu0 %v833
        %v852 = vpop.f32.mrf.mxu0
        %v853 = vadd.f32 0.0, %v852
        %854 = vdwg.mxu0
        %v855 = vld [vmem:[%s5] sm:$0xff]
        %v856 = vld [vmem:[%s5 + $0x8] sm:$0xff]
        %v857 = vld [vmem:[%s5 + $0x10] sm:$0xff]
        %v858 = vld [vmem:[%s5 + $0x18] sm:$0xff]
        %v860 = vsel %vm435, %v784, 0
        %862 = vmatpush.msra.mxu0 0.0
        %863 = vmatpush.msra.mxu0 0.0
        %864 = vmatpush.msra.mxu0 0.0
        %865 = vmatpush.msra.mxu0 0.0
        %866 = vmatpush.msra.mxu0 0.0
        %867 = vmatpush.msra.mxu0 0.0
        %868 = vmatpush.msra.mxu0 0.0
        %869 = vmatpush.msra.mxu0 0.0
        %870 = vmatpush.msra.mxu0 0.0
        %871 = vmatpush.msra.mxu0 0.0
        %872 = vmatpush.msra.mxu0 0.0
        %873 = vmatpush.msra.mxu0 0.0
        %874 = vmatpush.msra.mxu0 0.0
        %875 = vmatpush.msra.mxu0 0.0
        %876 = vmatpush.msra.mxu0 0.0
        %877 = vmatpush.msra.mxu0 %v855
        %878 = vmatmul.f32.gmra.mxu0 %v860
        %v879 = vpop.f32.mrf.mxu0
        %v880 = vadd.f32 0.0, %v879
        %881 = vdwg.mxu0
        %v883 = vsel %vm435, %v807, 0
        %885 = vmatpush.msra.mxu0 0.0
        %886 = vmatpush.msra.mxu0 0.0
        %887 = vmatpush.msra.mxu0 0.0
        %888 = vmatpush.msra.mxu0 0.0
        %889 = vmatpush.msra.mxu0 0.0
        %890 = vmatpush.msra.mxu0 0.0
        %891 = vmatpush.msra.mxu0 0.0
        %892 = vmatpush.msra.mxu0 0.0
        %893 = vmatpush.msra.mxu0 0.0
        %894 = vmatpush.msra.mxu0 0.0
        %895 = vmatpush.msra.mxu0 0.0
        %896 = vmatpush.msra.mxu0 0.0
        %897 = vmatpush.msra.mxu0 0.0
        %898 = vmatpush.msra.mxu0 0.0
        %899 = vmatpush.msra.mxu0 0.0
        %900 = vmatpush.msra.mxu0 %v856
        %901 = vmatmul.f32.gmra.mxu0 %v883
        %v902 = vpop.f32.mrf.mxu0
        %v903 = vadd.f32 0.0, %v902
        %904 = vdwg.mxu0
        %v906 = vsel %vm435, %v830, 0
        %908 = vmatpush.msra.mxu0 0.0
        %909 = vmatpush.msra.mxu0 0.0
        %910 = vmatpush.msra.mxu0 0.0
        %911 = vmatpush.msra.mxu0 0.0
        %912 = vmatpush.msra.mxu0 0.0
        %913 = vmatpush.msra.mxu0 0.0
        %914 = vmatpush.msra.mxu0 0.0
        %915 = vmatpush.msra.mxu0 0.0
        %916 = vmatpush.msra.mxu0 0.0
        %917 = vmatpush.msra.mxu0 0.0
        %918 = vmatpush.msra.mxu0 0.0
        %919 = vmatpush.msra.mxu0 0.0
        %920 = vmatpush.msra.mxu0 0.0
        %921 = vmatpush.msra.mxu0 0.0
        %922 = vmatpush.msra.mxu0 0.0
        %923 = vmatpush.msra.mxu0 %v857
        %924 = vmatmul.f32.gmra.mxu0 %v906
        %v925 = vpop.f32.mrf.mxu0
        %v926 = vadd.f32 0.0, %v925
        %927 = vdwg.mxu0
        %v929 = vsel %vm435, %v853, 0
        %931 = vmatpush.msra.mxu0 0.0
        %932 = vmatpush.msra.mxu0 0.0
        %933 = vmatpush.msra.mxu0 0.0
        %934 = vmatpush.msra.mxu0 0.0
        %935 = vmatpush.msra.mxu0 0.0
        %936 = vmatpush.msra.mxu0 0.0
        %937 = vmatpush.msra.mxu0 0.0
        %938 = vmatpush.msra.mxu0 0.0
        %939 = vmatpush.msra.mxu0 0.0
        %940 = vmatpush.msra.mxu0 0.0
        %941 = vmatpush.msra.mxu0 0.0
        %942 = vmatpush.msra.mxu0 0.0
        %943 = vmatpush.msra.mxu0 0.0
        %944 = vmatpush.msra.mxu0 0.0
        %945 = vmatpush.msra.mxu0 0.0
        %946 = vmatpush.msra.mxu0 %v858
        %947 = vmatmul.f32.gmra.mxu0 %v929
        %v948 = vpop.f32.mrf.mxu0
        %v949 = vadd.f32 0.0, %v948
        %950 = vdwg.mxu0
        %v951 = vadd.f32 %v880, %v903
        %v952 = vadd.f32 %v951, %v926
        %v953 = vadd.f32 %v952, %v949
        %v954 = vld [vmem:[%s6] sm:$0x1]
        %v956 = vperm.slane %v954, 0
        %v958 = vadd.f32 %v953, %v956
        %959 = vst [vmem:[%s418] sm:$0xff] %v958
        %s960 = sand.u32 %s205, 1
        %s961 = scalar_lea.sflag [#allocation4], %s960
        %s962 = sand.u32 %s205, 1
        %s963 = smul.addr %s962, 8
        %s964 = scalar_lea.vmem [#allocation10], %s963
        // Predicated region
        $region65: #{tpu_custom_call.1} parent=47 // pred_check
          %p965 = pneg %p215
        $region66: #{tpu_custom_call.1} parent=47 // pred_check_branch
          %967 = sbr.rel (%p965) target = $region68
        $region67: #{tpu_custom_call.1} parent=47 // pred_region
          %969 = vsyncadd %s961, 0
          %s970 = smul.addr %s30, 8
          %s971 = scalar_lea.hbm %s7, %s970
          %s973 = sshll.u32 %s964, 4
          %s974 = int_to_ptr.vmem [resolvable:$true] %s973
          %s975 = sshll.u32 %s971, 4
          %s976 = int_to_ptr.hbm [resolvable:$true] %s975
          %978 = dma.vmem_to_hbm [thread:$0]  %s974, 128, %s976, %s961
        $region68: #{tpu_custom_call.1} parent=47 // pred_fallthru
          _
      $region48: #{tpu_custom_call.1} parent=5 // pred_fallthru
        _
      %p979 = scmp.le.s32.totalorder 2, %s25
      // Predicated region
      $region69: #{tpu_custom_call.1} parent=5 // pred_check
        %p980 = pneg %p979
      $region70: #{tpu_custom_call.1} parent=5 // pred_check_branch
        %982 = sbr.rel (%p980) target = $region72
      $region71: #{tpu_custom_call.1} parent=5 // pred_region
        %s983 = ssub.s32 %s25, 2
        // Predicated region
        $region73: #{tpu_custom_call.1} parent=71 // pred_check
          %p984 = pneg %p221
        $region74: #{tpu_custom_call.1} parent=71 // pred_check_branch
          %986 = sbr.rel (%p984) target = $region76
        $region75: #{tpu_custom_call.1} parent=71 // pred_region
          %s987 = sand.u32 %s206, 1
          %s988 = scalar_lea.sflag [#allocation4], %s987
          %s989 = sand.u32 %s206, 1
          %s990 = smul.addr %s989, 8
          %s991 = scalar_lea.vmem [#allocation10], %s990
          %993 = dma.done %s988, 128
        $region76: #{tpu_custom_call.1} parent=71 // pred_fallthru
          _
      $region72: #{tpu_custom_call.1} parent=5 // pred_fallthru
        _
    $region6: #{tpu_custom_call.1} parent=1 // loop_footer
      %s29 = sadd.s32 1, %s25
    $region7: #{tpu_custom_call.1} parent=1 // loop_footer_branch
      %24 = sbr.rel target = $region3
    $region8: #{tpu_custom_call.1} parent=1 // loop_exit
      _
    %994 = vsyncpa [#allocation3], 1
    %s995 = scalar_lea.sflag [#allocation3], 1
    %996 = vsyncpa %s995, 1
    %997 = vsyncpa [#allocation6], 1
    %s998 = scalar_lea.sflag [#allocation6], 1
    %999 = vsyncpa %s998, 1
    %1000 = vsyncpa [#allocation9], 1
    %s1001 = scalar_lea.sflag [#allocation9], 1
    %1002 = vsyncpa %s1001, 1
    %1003 = vsyncpa [#allocation4], 1
    %s1004 = scalar_lea.sflag [#allocation4], 1
    %1005 = vsyncpa %s1004, 1

</llo_original>
